<compile_context>
chip_gen: v5e
topology: v5e:2x2
jax: 0.10.0
libtpu: 0.0.40
codegen_flags: <defaults>
</compile_context>

<pallas_src>
import jax
import jax.numpy as jnp
from jax.experimental import pallas as pl
from jax.experimental.pallas import tpu as pltpu


def outconv_kernel(x_ref, w_ref, b_ref, o_ref):
    """x_ref: (C_in, rows_tile, 128) VMEM; w_ref: (C_out, C_in) SMEM;
    b_ref: (C_out,) SMEM; o_ref: (C_out, rows_tile, 128) VMEM."""
    c_out, c_in = w_ref.shape
    for o in range(c_out):                       # unrolled: C_out is tiny
        acc = x_ref[0] * w_ref[o, 0]             # dense (rows, 128) VPU mul
        for c in range(1, c_in):                 # unrolled: C_in is tiny
            acc = acc + x_ref[c] * w_ref[o, c]
        acc = acc + b_ref[o]
        # Exact sigmoid: exp + reciprocal both issue on the EUP slot, which is
        # otherwise idle; this kernel is HBM-bound so the extra Newton step of
        # the exact divide is free and keeps full f32 accuracy.
        y = 1.0 / (1.0 + jnp.exp(-acc))
        o_ref[o] = y.astype(o_ref.dtype)


def outconv_forward(x_nchw, weight, bias, *, vmem_budget_bytes=24 * 1024 * 1024):
    """x_nchw: (B, C_in, H, W); weight: (C_out, C_in, 1, 1); bias: (C_out,)."""
    B, C_in, H, W = x_nchw.shape
    C_out = weight.shape[0]
    S = H * W
    LANE, SUB = 128, 8

    # ---- choose a lane/sublane-dense spatial tiling -------------------------
    rows_total = -(-S // LANE)                              # ceil(S / 128)
    # Per spatial "row" of 128 lanes the pipeline holds C_in input rows and
    # C_out output rows, each double-buffered, in f32.
    bytes_per_row = 2 * (C_in + C_out) * LANE * x_nchw.dtype.itemsize
    max_rows = max(SUB, vmem_budget_bytes // bytes_per_row)
    n_tiles = max(1, -(-rows_total // max_rows))
    rows_tile = -(-rows_total // n_tiles)                   # balance the tiles
    rows_tile = -(-rows_tile // SUB) * SUB                  # sublane multiple
    rows_pad = n_tiles * rows_tile
    S_pad = rows_pad * LANE

    # ---- native-layout views only (contiguous reshapes, no transposes) ------
    x3 = x_nchw.reshape(B, C_in, S)
    if S_pad != S:
        x3 = jnp.pad(x3, ((0, 0), (0, 0), (0, S_pad - S)))
    x4 = x3.reshape(B, C_in, rows_pad, LANE)
    w2 = weight.reshape(C_out, C_in)
    b1 = bias.reshape(C_out)

    out4 = pl.pallas_call(
        outconv_kernel,
        out_shape=jax.ShapeDtypeStruct((B, C_out, rows_pad, LANE), x_nchw.dtype),
        grid=(B, n_tiles),
        in_specs=[
            # Batch dim squeezed; last two dims are (sublane, lane) dense.
            pl.BlockSpec((None, C_in, rows_tile, LANE), lambda b, s: (b, 0, s, 0)),
            # Tiny weight/bias live in SMEM once; read as scalars in-kernel.
            pl.BlockSpec(memory_space=pltpu.MemorySpace.SMEM),
            pl.BlockSpec(memory_space=pltpu.MemorySpace.SMEM),
        ],
        out_specs=pl.BlockSpec((None, C_out, rows_tile, LANE),
                               lambda b, s: (b, 0, s, 0)),
        compiler_params=pltpu.CompilerParams(
            # Both axes independent -> parallel (uses both TCs on v7x).
            dimension_semantics=("parallel", "parallel"),
            # ~2x the double-buffered working set; safe under v7x's 64 MiB.
            vmem_limit_bytes=48 * 1024 * 1024,
        ),
    )(x4, w2, b1)

    out3 = out4.reshape(B, C_out, S_pad)
    if S_pad != S:
        out3 = out3[:, :, :S]
    return out3.reshape(B, C_out, H, W)


if __name__ == "__main__":
    key = jax.random.PRNGKey(0)
    k_x, k_w, k_b = jax.random.split(key, 3)

    B, C_in, C_out, H, W = 2, 4, 3, 16, 16

    x = jax.random.normal(k_x, (B, C_in, H, W), dtype=jnp.float32)
    # Deterministic synthetic parameters matching nn.Conv2d(C_in, C_out, 1).
    fan_in = C_in * 1 * 1
    bound = 1.0 / (fan_in ** 0.5)
    weight = jax.random.uniform(k_w, (C_out, C_in, 1, 1),
                                minval=-bound, maxval=bound, dtype=jnp.float32)
    bias = jax.random.uniform(k_b, (C_out,),
                              minval=-bound, maxval=bound, dtype=jnp.float32)

    out = outconv_forward(x, weight, bias)
    jax.block_until_ready(out)

    # Reference: 1x1 conv == channel matmul, then sigmoid.
    ref = jax.nn.sigmoid(
        jnp.einsum("bchw,oc->bohw", x, weight.reshape(C_out, C_in))
        + bias[None, :, None, None])
    assert out.shape == (B, C_out, H, W)
    assert jnp.allclose(out, ref, atol=1e-4, rtol=1e-4)

    print("KERNEL_OK")
</pallas_src>

<mosaic_0001>
module attributes {stable_mosaic.version = 11 : i64} {
  func.func @outconv_kernel(%arg0: i32, %arg1: i32, %arg2: memref<1x4x8x128xf32, #tpu.memory_space<vmem>>, %arg3: memref<3x4xf32, #tpu.memory_space<smem>>, %arg4: memref<3xf32, #tpu.memory_space<smem>>, %arg5: memref<1x3x8x128xf32, #tpu.memory_space<vmem>>) attributes {dimension_semantics = [#tpu.dimension_semantics<parallel>, #tpu.dimension_semantics<parallel>], iteration_bounds = array<i64: 2, 1>, scalar_prefetch = 0 : i64, scratch_operands = 0 : i64, tpu.core_type = #tpu.core_type<tc>, window_params = [{transform_indices = @transform_0, window_bounds = array<i64: 1, 4, 8, 128>}, {transform_indices = @transform_1, window_bounds = array<i64: 3, 4>}, {transform_indices = @transform_2, window_bounds = array<i64: 3>}, {transform_indices = @transform_3, window_bounds = array<i64: 1, 3, 8, 128>}]} {
    %c0 = arith.constant 0 : index
    %c0_0 = arith.constant 0 : index
    %c0_1 = arith.constant 0 : index
    %c0_2 = arith.constant 0 : index
    %0 = vector.load %arg2[%c0, %c0_0, %c0_1, %c0_2] : memref<1x4x8x128xf32, #tpu.memory_space<vmem>>, vector<1x1x8x128xf32>
    %1 = vector.shape_cast %0 : vector<1x1x8x128xf32> to vector<8x128xf32>
    %c0_3 = arith.constant 0 : index
    %c0_4 = arith.constant 0 : index
    %2 = memref.load %arg3[%c0_3, %c0_4] : memref<3x4xf32, #tpu.memory_space<smem>>
    %3 = vector.broadcast %2 : f32 to vector<8x128xf32>
    %4 = arith.mulf %1, %3 : vector<8x128xf32>
    %c0_5 = arith.constant 0 : index
    %c1 = arith.constant 1 : index
    %c0_6 = arith.constant 0 : index
    %c0_7 = arith.constant 0 : index
    %5 = vector.load %arg2[%c0_5, %c1, %c0_6, %c0_7] : memref<1x4x8x128xf32, #tpu.memory_space<vmem>>, vector<1x1x8x128xf32>
    %6 = vector.shape_cast %5 : vector<1x1x8x128xf32> to vector<8x128xf32>
    %c0_8 = arith.constant 0 : index
    %c1_9 = arith.constant 1 : index
    %7 = memref.load %arg3[%c0_8, %c1_9] : memref<3x4xf32, #tpu.memory_space<smem>>
    %8 = vector.broadcast %7 : f32 to vector<8x128xf32>
    %9 = arith.mulf %6, %8 : vector<8x128xf32>
    %10 = arith.addf %4, %9 : vector<8x128xf32>
    %c0_10 = arith.constant 0 : index
    %c2 = arith.constant 2 : index
    %c0_11 = arith.constant 0 : index
    %c0_12 = arith.constant 0 : index
    %11 = vector.load %arg2[%c0_10, %c2, %c0_11, %c0_12] : memref<1x4x8x128xf32, #tpu.memory_space<vmem>>, vector<1x1x8x128xf32>
    %12 = vector.shape_cast %11 : vector<1x1x8x128xf32> to vector<8x128xf32>
    %c0_13 = arith.constant 0 : index
    %c2_14 = arith.constant 2 : index
    %13 = memref.load %arg3[%c0_13, %c2_14] : memref<3x4xf32, #tpu.memory_space<smem>>
    %14 = vector.broadcast %13 : f32 to vector<8x128xf32>
    %15 = arith.mulf %12, %14 : vector<8x128xf32>
    %16 = arith.addf %10, %15 : vector<8x128xf32>
    %c0_15 = arith.constant 0 : index
    %c3 = arith.constant 3 : index
    %c0_16 = arith.constant 0 : index
    %c0_17 = arith.constant 0 : index
    %17 = vector.load %arg2[%c0_15, %c3, %c0_16, %c0_17] : memref<1x4x8x128xf32, #tpu.memory_space<vmem>>, vector<1x1x8x128xf32>
    %18 = vector.shape_cast %17 : vector<1x1x8x128xf32> to vector<8x128xf32>
    %c0_18 = arith.constant 0 : index
    %c3_19 = arith.constant 3 : index
    %19 = memref.load %arg3[%c0_18, %c3_19] : memref<3x4xf32, #tpu.memory_space<smem>>
    %20 = vector.broadcast %19 : f32 to vector<8x128xf32>
    %21 = arith.mulf %18, %20 : vector<8x128xf32>
    %22 = arith.addf %16, %21 : vector<8x128xf32>
    %c0_20 = arith.constant 0 : index
    %23 = memref.load %arg4[%c0_20] : memref<3xf32, #tpu.memory_space<smem>>
    %24 = vector.broadcast %23 : f32 to vector<8x128xf32>
    %25 = arith.addf %22, %24 : vector<8x128xf32>
    %cst = arith.constant 0.000000e+00 : f32
    %26 = vector.broadcast %cst : f32 to vector<8x128xf32>
    %27 = arith.subf %26, %25 : vector<8x128xf32>
    %28 = math.exp %27 : vector<8x128xf32>
    %cst_21 = arith.constant 1.000000e+00 : f32
    %29 = vector.broadcast %cst_21 : f32 to vector<8x128xf32>
    %30 = arith.addf %29, %28 : vector<8x128xf32>
    %cst_22 = arith.constant 1.000000e+00 : f32
    %31 = vector.broadcast %cst_22 : f32 to vector<8x128xf32>
    %32 = arith.divf %31, %30 : vector<8x128xf32>
    %c0_23 = arith.constant 0 : index
    %c0_24 = arith.constant 0 : index
    %c0_25 = arith.constant 0 : index
    %c0_26 = arith.constant 0 : index
    %33 = vector.load %arg5[%c0_23, %c0_24, %c0_25, %c0_26] : memref<1x3x8x128xf32, #tpu.memory_space<vmem>>, vector<1x1x8x128xf32>
    %34 = vector.shape_cast %33 : vector<1x1x8x128xf32> to vector<8x128xf32>
    %35 = vector.shape_cast %32 : vector<8x128xf32> to vector<1x1x8x128xf32>
    tpu.vector_store %arg5[%c0_23, %c0_24, %c0_25, %c0_26], %35 {strides = array<i32>} : memref<1x3x8x128xf32, #tpu.memory_space<vmem>>, vector<1x1x8x128xf32>,
    %c0_27 = arith.constant 0 : index
    %c0_28 = arith.constant 0 : index
    %c0_29 = arith.constant 0 : index
    %c0_30 = arith.constant 0 : index
    %36 = vector.load %arg2[%c0_27, %c0_28, %c0_29, %c0_30] : memref<1x4x8x128xf32, #tpu.memory_space<vmem>>, vector<1x1x8x128xf32>
    %37 = vector.shape_cast %36 : vector<1x1x8x128xf32> to vector<8x128xf32>
    %c1_31 = arith.constant 1 : index
    %c0_32 = arith.constant 0 : index
    %38 = memref.load %arg3[%c1_31, %c0_32] : memref<3x4xf32, #tpu.memory_space<smem>>
    %39 = vector.broadcast %38 : f32 to vector<8x128xf32>
    %40 = arith.mulf %37, %39 : vector<8x128xf32>
    %c0_33 = arith.constant 0 : index
    %c1_34 = arith.constant 1 : index
    %c0_35 = arith.constant 0 : index
    %c0_36 = arith.constant 0 : index
    %41 = vector.load %arg2[%c0_33, %c1_34, %c0_35, %c0_36] : memref<1x4x8x128xf32, #tpu.memory_space<vmem>>, vector<1x1x8x128xf32>
    %42 = vector.shape_cast %41 : vector<1x1x8x128xf32> to vector<8x128xf32>
    %c1_37 = arith.constant 1 : index
    %c1_38 = arith.constant 1 : index
    %43 = memref.load %arg3[%c1_37, %c1_38] : memref<3x4xf32, #tpu.memory_space<smem>>
    %44 = vector.broadcast %43 : f32 to vector<8x128xf32>
    %45 = arith.mulf %42, %44 : vector<8x128xf32>
    %46 = arith.addf %40, %45 : vector<8x128xf32>
    %c0_39 = arith.constant 0 : index
    %c2_40 = arith.constant 2 : index
    %c0_41 = arith.constant 0 : index
    %c0_42 = arith.constant 0 : index
    %47 = vector.load %arg2[%c0_39, %c2_40, %c0_41, %c0_42] : memref<1x4x8x128xf32, #tpu.memory_space<vmem>>, vector<1x1x8x128xf32>
    %48 = vector.shape_cast %47 : vector<1x1x8x128xf32> to vector<8x128xf32>
    %c1_43 = arith.constant 1 : index
    %c2_44 = arith.constant 2 : index
    %49 = memref.load %arg3[%c1_43, %c2_44] : memref<3x4xf32, #tpu.memory_space<smem>>
    %50 = vector.broadcast %49 : f32 to vector<8x128xf32>
    %51 = arith.mulf %48, %50 : vector<8x128xf32>
    %52 = arith.addf %46, %51 : vector<8x128xf32>
    %c0_45 = arith.constant 0 : index
    %c3_46 = arith.constant 3 : index
    %c0_47 = arith.constant 0 : index
    %c0_48 = arith.constant 0 : index
    %53 = vector.load %arg2[%c0_45, %c3_46, %c0_47, %c0_48] : memref<1x4x8x128xf32, #tpu.memory_space<vmem>>, vector<1x1x8x128xf32>
    %54 = vector.shape_cast %53 : vector<1x1x8x128xf32> to vector<8x128xf32>
    %c1_49 = arith.constant 1 : index
    %c3_50 = arith.constant 3 : index
    %55 = memref.load %arg3[%c1_49, %c3_50] : memref<3x4xf32, #tpu.memory_space<smem>>
    %56 = vector.broadcast %55 : f32 to vector<8x128xf32>
    %57 = arith.mulf %54, %56 : vector<8x128xf32>
    %58 = arith.addf %52, %57 : vector<8x128xf32>
    %c1_51 = arith.constant 1 : index
    %59 = memref.load %arg4[%c1_51] : memref<3xf32, #tpu.memory_space<smem>>
    %60 = vector.broadcast %59 : f32 to vector<8x128xf32>
    %61 = arith.addf %58, %60 : vector<8x128xf32>
    %cst_52 = arith.constant 0.000000e+00 : f32
    %62 = vector.broadcast %cst_52 : f32 to vector<8x128xf32>
    %63 = arith.subf %62, %61 : vector<8x128xf32>
    %64 = math.exp %63 : vector<8x128xf32>
    %cst_53 = arith.constant 1.000000e+00 : f32
    %65 = vector.broadcast %cst_53 : f32 to vector<8x128xf32>
    %66 = arith.addf %65, %64 : vector<8x128xf32>
    %cst_54 = arith.constant 1.000000e+00 : f32
    %67 = vector.broadcast %cst_54 : f32 to vector<8x128xf32>
    %68 = arith.divf %67, %66 : vector<8x128xf32>
    %c0_55 = arith.constant 0 : index
    %c1_56 = arith.constant 1 : index
    %c0_57 = arith.constant 0 : index
    %c0_58 = arith.constant 0 : index
    %69 = vector.load %arg5[%c0_55, %c1_56, %c0_57, %c0_58] : memref<1x3x8x128xf32, #tpu.memory_space<vmem>>, vector<1x1x8x128xf32>
    %70 = vector.shape_cast %69 : vector<1x1x8x128xf32> to vector<8x128xf32>
    %71 = vector.shape_cast %68 : vector<8x128xf32> to vector<1x1x8x128xf32>
    tpu.vector_store %arg5[%c0_55, %c1_56, %c0_57, %c0_58], %71 {strides = array<i32>} : memref<1x3x8x128xf32, #tpu.memory_space<vmem>>, vector<1x1x8x128xf32>,
    %c0_59 = arith.constant 0 : index
    %c0_60 = arith.constant 0 : index
    %c0_61 = arith.constant 0 : index
    %c0_62 = arith.constant 0 : index
    %72 = vector.load %arg2[%c0_59, %c0_60, %c0_61, %c0_62] : memref<1x4x8x128xf32, #tpu.memory_space<vmem>>, vector<1x1x8x128xf32>
    %73 = vector.shape_cast %72 : vector<1x1x8x128xf32> to vector<8x128xf32>
    %c2_63 = arith.constant 2 : index
    %c0_64 = arith.constant 0 : index
    %74 = memref.load %arg3[%c2_63, %c0_64] : memref<3x4xf32, #tpu.memory_space<smem>>
    %75 = vector.broadcast %74 : f32 to vector<8x128xf32>
    %76 = arith.mulf %73, %75 : vector<8x128xf32>
    %c0_65 = arith.constant 0 : index
    %c1_66 = arith.constant 1 : index
    %c0_67 = arith.constant 0 : index
    %c0_68 = arith.constant 0 : index
    %77 = vector.load %arg2[%c0_65, %c1_66, %c0_67, %c0_68] : memref<1x4x8x128xf32, #tpu.memory_space<vmem>>, vector<1x1x8x128xf32>
    %78 = vector.shape_cast %77 : vector<1x1x8x128xf32> to vector<8x128xf32>
    %c2_69 = arith.constant 2 : index
    %c1_70 = arith.constant 1 : index
    %79 = memref.load %arg3[%c2_69, %c1_70] : memref<3x4xf32, #tpu.memory_space<smem>>
    %80 = vector.broadcast %79 : f32 to vector<8x128xf32>
    %81 = arith.mulf %78, %80 : vector<8x128xf32>
    %82 = arith.addf %76, %81 : vector<8x128xf32>
    %c0_71 = arith.constant 0 : index
    %c2_72 = arith.constant 2 : index
    %c0_73 = arith.constant 0 : index
    %c0_74 = arith.constant 0 : index
    %83 = vector.load %arg2[%c0_71, %c2_72, %c0_73, %c0_74] : memref<1x4x8x128xf32, #tpu.memory_space<vmem>>, vector<1x1x8x128xf32>
    %84 = vector.shape_cast %83 : vector<1x1x8x128xf32> to vector<8x128xf32>
    %c2_75 = arith.constant 2 : index
    %c2_76 = arith.constant 2 : index
    %85 = memref.load %arg3[%c2_75, %c2_76] : memref<3x4xf32, #tpu.memory_space<smem>>
    %86 = vector.broadcast %85 : f32 to vector<8x128xf32>
    %87 = arith.mulf %84, %86 : vector<8x128xf32>
    %88 = arith.addf %82, %87 : vector<8x128xf32>
    %c0_77 = arith.constant 0 : index
    %c3_78 = arith.constant 3 : index
    %c0_79 = arith.constant 0 : index
    %c0_80 = arith.constant 0 : index
    %89 = vector.load %arg2[%c0_77, %c3_78, %c0_79, %c0_80] : memref<1x4x8x128xf32, #tpu.memory_space<vmem>>, vector<1x1x8x128xf32>
    %90 = vector.shape_cast %89 : vector<1x1x8x128xf32> to vector<8x128xf32>
    %c2_81 = arith.constant 2 : index
    %c3_82 = arith.constant 3 : index
    %91 = memref.load %arg3[%c2_81, %c3_82] : memref<3x4xf32, #tpu.memory_space<smem>>
    %92 = vector.broadcast %91 : f32 to vector<8x128xf32>
    %93 = arith.mulf %90, %92 : vector<8x128xf32>
    %94 = arith.addf %88, %93 : vector<8x128xf32>
    %c2_83 = arith.constant 2 : index
    %95 = memref.load %arg4[%c2_83] : memref<3xf32, #tpu.memory_space<smem>>
    %96 = vector.broadcast %95 : f32 to vector<8x128xf32>
    %97 = arith.addf %94, %96 : vector<8x128xf32>
    %cst_84 = arith.constant 0.000000e+00 : f32
    %98 = vector.broadcast %cst_84 : f32 to vector<8x128xf32>
    %99 = arith.subf %98, %97 : vector<8x128xf32>
    %100 = math.exp %99 : vector<8x128xf32>
    %cst_85 = arith.constant 1.000000e+00 : f32
    %101 = vector.broadcast %cst_85 : f32 to vector<8x128xf32>
    %102 = arith.addf %101, %100 : vector<8x128xf32>
    %cst_86 = arith.constant 1.000000e+00 : f32
    %103 = vector.broadcast %cst_86 : f32 to vector<8x128xf32>
    %104 = arith.divf %103, %102 : vector<8x128xf32>
    %c0_87 = arith.constant 0 : index
    %c2_88 = arith.constant 2 : index
    %c0_89 = arith.constant 0 : index
    %c0_90 = arith.constant 0 : index
    %105 = vector.load %arg5[%c0_87, %c2_88, %c0_89, %c0_90] : memref<1x3x8x128xf32, #tpu.memory_space<vmem>>, vector<1x1x8x128xf32>
    %106 = vector.shape_cast %105 : vector<1x1x8x128xf32> to vector<8x128xf32>
    %107 = vector.shape_cast %104 : vector<8x128xf32> to vector<1x1x8x128xf32>
    tpu.vector_store %arg5[%c0_87, %c2_88, %c0_89, %c0_90], %107 {strides = array<i32>} : memref<1x3x8x128xf32, #tpu.memory_space<vmem>>, vector<1x1x8x128xf32>,
    return
  }
  func.func @transform_0(%arg0: i32, %arg1: i32) -> (i32, i32, i32, i32) {
    %c0_i32 = arith.constant 0 : i32
    %c0_i32_0 = arith.constant 0 : i32
    %c0_i32_1 = arith.constant 0 : i32
    return %arg0, %c0_i32, %arg1, %c0_i32_0 : i32, i32, i32, i32
  }
  func.func @transform_1(%arg0: i32, %arg1: i32) -> (i32, i32) {
    %c0_i32 = arith.constant 0 : i32
    %c0_i32_0 = arith.constant 0 : i32
    %c0_i32_1 = arith.constant 0 : i32
    return %c0_i32, %c0_i32_0 : i32, i32
  }
  func.func @transform_2(%arg0: i32, %arg1: i32) -> i32 {
    %c0_i32 = arith.constant 0 : i32
    %c0_i32_0 = arith.constant 0 : i32
    return %c0_i32 : i32
  }
  func.func @transform_3(%arg0: i32, %arg1: i32) -> (i32, i32, i32, i32) {
    %c0_i32 = arith.constant 0 : i32
    %c0_i32_0 = arith.constant 0 : i32
    %c0_i32_1 = arith.constant 0 : i32
    return %arg0, %c0_i32, %arg1, %c0_i32_0 : i32, i32, i32, i32
  }
}

</mosaic_0001>

<llo_original>
// kernel: tpu_custom_call.1
$region0: #{tpu_custom_call.1}
  #allocation0 [shape = 'u32[]', space=smem, size = 0x4, offset = 0x4, fixed_abs, tag = 'smem constant byte address 0x4 - core index']
  #allocation1 [shape = 'u32[72,128]{1,0:T(1,128)}', space=vmem, size = 0x9000, scoped, tag = 'internal scratch']
  %s0 = inlined_call_operand.hbm [shape: f32[2,4,8,128], index: 0, kind: input, shape index: {}]
  %s1 = inlined_call_operand.hbm [shape: f32[3,4], index: 1, kind: input, shape index: {}]
  %s2 = inlined_call_operand.vmem [shape: f32[3], index: 2, kind: input, shape index: {}]
  %s3 = inlined_call_operand.hbm [shape: f32[2,3,8,128], index: 3, kind: output, shape index: {}]
  %s4 = sld [smem:[#allocation0]]
  $region57: #{tpu_custom_call.1} parent=0
    _
  %s6 = ssub.s32 1, %s4
  %s7 = scalar_select 0, %s6, %s4
  $region1: #{tpu_custom_call.1} parent=0
    #allocation2 [shape = 'u8[32768]{0}', space=vmem, size = 0x8000, scoped, tag = 'input window, operand 0']
    #allocation3 [shape = 's32[2]{0}', space=sflag, size = 0x8, scoped, tag = 'scoped memory for tpu_custom_call.1']
    #allocation4 [shape = 's32[2]{0}', space=sflag, size = 0x8, scoped, tag = 'scoped memory for tpu_custom_call.1']
    #allocation5 [shape = 's32[2]{0}', space=sflag, size = 0x8, scoped, tag = 'scoped memory for tpu_custom_call.1']
    #allocation6 [shape = 's32[2]{0}', space=sflag, size = 0x8, scoped, tag = 'scoped memory for tpu_custom_call.1']
    #allocation7 [shape = 'u8[2048]{0}', space=smem, size = 0x800, scoped, tag = 'input window, operand 1, single buffered']
    #allocation8 [shape = 'u8[512]{0}', space=smem, size = 0x200, scoped, tag = 'input window, operand 2, single buffered']
    #allocation9 [shape = 'u8[24576]{0}', space=vmem, size = 0x6000, scoped, tag = 'output window, operand 0']
    %8 = vsyncpa [#allocation3], 0
    %s9 = scalar_lea.sflag [#allocation3], 1
    %10 = vsyncpa %s9, 0
    %11 = vsyncpa [#allocation5], 0
    %12 = vsyncpa [#allocation6], 0
    %13 = vsyncpa [#allocation4], 0
    %s14 = scalar_lea.sflag [#allocation4], 1
    %15 = vsyncpa %s14, 0
    loop: start=0, step=1, limit=4
    $region2: #{tpu_custom_call.1} parent=1 // loop_pre_header
      _
    $region3: #{tpu_custom_call.1} parent=1 // loop_header
      %s17 = sphi 0, %s21
      %p18 = scmp.ge.s32.totalorder %s17, 4
      %s24 = sphi 0, %s36
      %s25 = sphi 0, %s32
      %s26 = sphi 0, %s24
      %s27 = sphi 0, %s25
      %s28 = sphi 0, %s26
      %s29 = sphi 0, %s27
      %s41 = sphi 0, %s43
      %s44 = sphi 0, %s41
      %s45 = sphi 0, %s44
      %s61 = sphi 0, %s45
      %s65 = sphi 0, %s65
      %s67 = sphi 0, %s65
      %s68 = sphi 0, %s67
      %s82 = sphi 0, %s68
      %s86 = sphi 0, %s86
      %s88 = sphi 0, %s86
      %s89 = sphi 0, %s88
      %s103 = sphi 0, %s89
      %s111 = sphi 0, %s113
      %s114 = sphi 0, %s111
      %s115 = sphi 0, %s114
      %s131 = sphi 0, %s115
    $region4: #{tpu_custom_call.1} parent=1 // loop_header_branch
      %20 = sbr.rel (%p18) target = $region8
    $region5: #{tpu_custom_call.1} parent=1 // loop_body
      %s22 = ssub.s32 %s17, 1
      %s23 = ssub.s32 %s17, 2
      %s30 = sadd.s32 1, %s25
      %p31 = scmp.ge.s32.totalorder %s30, 1
      %s32 = scalar_select %p31, 0, %s30
      %s33 = sadd.s32 1, %s24
      %s34 = scalar_select %p31, %s33, %s24
      %p35 = scmp.ge.s32.totalorder %s34, 2
      %s36 = scalar_select %p35, 0, %s34
      %s37 = ssub.s32 %s24, %s36
      %s38 = ssub.s32 %s25, %s32
      %s39 = sor.u32 %s37, %s38
      %p40 = scmp.eq.s32.totalorder %s39, 0
      %s42 = sadd.s32 %s41, 1
      %s43 = scalar_select %p40, %s41, %s42
      %p46 = pneg %p40
      %p47 = scmp.eq.s32.totalorder %s17, 1
      %p48 = por %p46, %p47
      %p49 = scmp.ne.s32.totalorder %s41, %s44
      %p50 = scmp.eq.s32.totalorder %s17, 0
      %p51 = por %p49, %p50
      %p52 = scmp.ne.s32.totalorder %s41, %s44
      %p53 = scmp.eq.s32.totalorder %s22, 1
      %p54 = por %p52, %p53
      %p55 = scmp.ne.s32.totalorder %s44, %s45
      %p56 = scmp.eq.s32.totalorder %s22, 0
      %p57 = por %p55, %p56
      %p58 = scmp.ne.s32.totalorder %s44, %s45
      %p59 = scmp.eq.s32.totalorder %s23, 1
      %p60 = por %p58, %p59
      %p62 = scmp.ne.s32.totalorder %s45, %s61
      %p63 = scmp.eq.s32.totalorder %s23, 0
      %p64 = por %p62, %p63
      %s66 = sadd.s32 %s65, 1
      %p69 = scmp.eq.s32.totalorder %s17, 1
      %p70 = scmp.ne.s32.totalorder %s65, %s67
      %p71 = scmp.eq.s32.totalorder %s17, 0
      %p72 = por %p70, %p71
      %p73 = scmp.ne.s32.totalorder %s65, %s67
      %p74 = scmp.eq.s32.totalorder %s22, 1
      %p75 = por %p73, %p74
      %p76 = scmp.ne.s32.totalorder %s67, %s68
      %p77 = scmp.eq.s32.totalorder %s22, 0
      %p78 = por %p76, %p77
      %p79 = scmp.ne.s32.totalorder %s67, %s68
      %p80 = scmp.eq.s32.totalorder %s23, 1
      %p81 = por %p79, %p80
      %p83 = scmp.ne.s32.totalorder %s68, %s82
      %p84 = scmp.eq.s32.totalorder %s23, 0
      %p85 = por %p83, %p84
      %s87 = sadd.s32 %s86, 1
      %p90 = scmp.eq.s32.totalorder %s17, 1
      %p91 = scmp.ne.s32.totalorder %s86, %s88
      %p92 = scmp.eq.s32.totalorder %s17, 0
      %p93 = por %p91, %p92
      %p94 = scmp.ne.s32.totalorder %s86, %s88
      %p95 = scmp.eq.s32.totalorder %s22, 1
      %p96 = por %p94, %p95
      %p97 = scmp.ne.s32.totalorder %s88, %s89
      %p98 = scmp.eq.s32.totalorder %s22, 0
      %p99 = por %p97, %p98
      %p100 = scmp.ne.s32.totalorder %s88, %s89
      %p101 = scmp.eq.s32.totalorder %s23, 1
      %p102 = por %p100, %p101
      %p104 = scmp.ne.s32.totalorder %s89, %s103
      %p105 = scmp.eq.s32.totalorder %s23, 0
      %p106 = por %p104, %p105
      %s107 = ssub.s32 %s24, %s36
      %s108 = ssub.s32 %s25, %s32
      %s109 = sor.u32 %s107, %s108
      %p110 = scmp.eq.s32.totalorder %s109, 0
      %s112 = sadd.s32 %s111, 1
      %s113 = scalar_select %p110, %s111, %s112
      %p116 = pneg %p110
      %p117 = scmp.eq.s32.totalorder %s17, 1
      %p118 = por %p116, %p117
      %p119 = scmp.ne.s32.totalorder %s111, %s114
      %p120 = scmp.eq.s32.totalorder %s17, 0
      %p121 = por %p119, %p120
      %p122 = scmp.ne.s32.totalorder %s111, %s114
      %p123 = scmp.eq.s32.totalorder %s22, 1
      %p124 = por %p122, %p123
      %p125 = scmp.ne.s32.totalorder %s114, %s115
      %p126 = scmp.eq.s32.totalorder %s22, 0
      %p127 = por %p125, %p126
      %p128 = scmp.ne.s32.totalorder %s114, %s115
      %p129 = scmp.eq.s32.totalorder %s23, 1
      %p130 = por %p128, %p129
      %p132 = scmp.ne.s32.totalorder %s115, %s131
      %p133 = scmp.eq.s32.totalorder %s23, 0
      %p134 = por %p132, %p133
      %p135 = scmp.le.s32.totalorder 1, %s17
      %p136 = scmp.lt.s32.totalorder %s17, 3
      %p137 = pnand %p135, %p136
      %p138 = pneg %p137
      // Predicated region
      $region9: #{tpu_custom_call.1} parent=5 // pred_check
        _
      $region10: #{tpu_custom_call.1} parent=5 // pred_check_branch
        %140 = sbr.rel (%p137) target = $region12
      $region11: #{tpu_custom_call.1} parent=5 // pred_region
        %s141 = ssub.s32 %s17, 1
        // Predicated region
        $region13: #{tpu_custom_call.1} parent=11 // pred_check
          %p142 = pneg %p78
        $region14: #{tpu_custom_call.1} parent=11 // pred_check_branch
          %144 = sbr.rel (%p142) target = $region16
        $region15: #{tpu_custom_call.1} parent=11 // pred_region
          %146 = vsyncadd [#allocation5], 0
          %s148 = sshll.u32 %s1, 4
          %s149 = int_to_ptr.hbm [resolvable:$true] %s148
          %151 = dma.hbm_to_smem %s149, 64, [#allocation7], [#allocation5]
        $region16: #{tpu_custom_call.1} parent=11 // pred_fallthru
          _
        // Predicated region
        $region17: #{tpu_custom_call.1} parent=11 // pred_check
          %p152 = pneg %p99
        $region18: #{tpu_custom_call.1} parent=11 // pred_check_branch
          %154 = sbr.rel (%p152) target = $region20
        $region19: #{tpu_custom_call.1} parent=11 // pred_region
          %156 = vsyncadd [#allocation6], 0
          %s158 = sshll.u32 %s2, 4
          %s159 = int_to_ptr.vmem [resolvable:$true] %s158
          %161 = dma.vmem_to_smem %s159, 16, [#allocation8], [#allocation6]
        $region20: #{tpu_custom_call.1} parent=11 // pred_fallthru
          _
      $region12: #{tpu_custom_call.1} parent=5 // pred_fallthru
        _
      %p162 = scmp.lt.s32.totalorder %s17, 2
      // Predicated region
      $region21: #{tpu_custom_call.1} parent=5 // pred_check
        %p163 = pneg %p162
      $region22: #{tpu_custom_call.1} parent=5 // pred_check_branch
        %165 = sbr.rel (%p163) target = $region24
      $region23: #{tpu_custom_call.1} parent=5 // pred_region
        // Predicated region
        $region25: #{tpu_custom_call.1} parent=23 // pred_check
          %p166 = pneg %p51
        $region26: #{tpu_custom_call.1} parent=23 // pred_check_branch
          %168 = sbr.rel (%p166) target = $region28
        $region27: #{tpu_custom_call.1} parent=23 // pred_region
          %s169 = sand.u32 %s41, 1
          %s170 = scalar_lea.sflag [#allocation3], %s169
          %s171 = sand.u32 %s41, 1
          %s172 = smul.addr %s171, 32
          %s173 = scalar_lea.vmem [#allocation2], %s172
          %175 = vsyncadd %s170, 0
          %s176 = smul.addr %s24, 4
          %s177 = sadd.s32 %s25, %s176
          %s178 = smul.addr %s177, 8
          %s179 = scalar_lea.hbm %s0, %s178
          %s180 = sshll.u32 %s179, 4
          %s181 = int_to_ptr.hbm [resolvable:$true] %s180
          %s182 = sshll.u32 %s173, 4
          %s183 = int_to_ptr.vmem [resolvable:$true] %s182
          %188 = dma.hbm_to_vmem [thread:$0]  %s181, 512, %s183, %s170, 128, 128, 8
        $region28: #{tpu_custom_call.1} parent=23 // pred_fallthru
          _
      $region24: #{tpu_custom_call.1} parent=5 // pred_fallthru
        _
      %p189 = scmp.le.s32.totalorder 1, %s17
      %p190 = scmp.lt.s32.totalorder %s17, 3
      %p191 = pnand %p189, %p190
      %p192 = pneg %p191
      // Predicated region
      $region29: #{tpu_custom_call.1} parent=5 // pred_check
        _
      $region30: #{tpu_custom_call.1} parent=5 // pred_check_branch
        %194 = sbr.rel (%p191) target = $region32
      $region31: #{tpu_custom_call.1} parent=5 // pred_region
        %s195 = ssub.s32 %s17, 1
        %s196 = sand.u32 %s44, 1
        %s197 = scalar_lea.sflag [#allocation3], %s196
        %s198 = sand.u32 %s44, 1
        %s199 = smul.addr %s198, 32
        %s200 = scalar_lea.vmem [#allocation2], %s199
        // Predicated region
        $region33: #{tpu_custom_call.1} parent=31 // pred_check
          %p201 = pneg %p57
        $region34: #{tpu_custom_call.1} parent=31 // pred_check_branch
          %203 = sbr.rel (%p201) target = $region36
        $region35: #{tpu_custom_call.1} parent=31 // pred_region
          %205 = dma.done %s197, 512
        $region36: #{tpu_custom_call.1} parent=31 // pred_fallthru
          _
        // Predicated region
        $region37: #{tpu_custom_call.1} parent=31 // pred_check
          %p206 = pneg %p78
        $region38: #{tpu_custom_call.1} parent=31 // pred_check_branch
          %208 = sbr.rel (%p206) target = $region40
        $region39: #{tpu_custom_call.1} parent=31 // pred_region
          %210 = dma.done [#allocation5], 64
        $region40: #{tpu_custom_call.1} parent=31 // pred_fallthru
          _
        // Predicated region
        $region41: #{tpu_custom_call.1} parent=31 // pred_check
          %p211 = pneg %p99
        $region42: #{tpu_custom_call.1} parent=31 // pred_check_branch
          %213 = sbr.rel (%p211) target = $region44
        $region43: #{tpu_custom_call.1} parent=31 // pred_region
          %215 = dma.done [#allocation6], 16
        $region44: #{tpu_custom_call.1} parent=31 // pred_fallthru
          _
        %216 = sfence
        %s217 = sand.u32 %s44, 1
        %s218 = scalar_lea.sflag [#allocation3], %s217
        %s219 = sand.u32 %s44, 1
        %s220 = smul.addr %s219, 32
        %s221 = scalar_lea.vmem [#allocation2], %s220
        %p222 = pneg %p57
        %p223 = pneg %p54
        %p224 = pneg %p78
        %p225 = pneg %p75
        %p226 = pneg %p99
        %p227 = pneg %p96
        %p228 = pneg %p127
        %p229 = pneg %p124
        %s230 = sand.u32 %s114, 1
        %s231 = scalar_lea.sflag [#allocation4], %s230
        %s232 = sand.u32 %s114, 1
        %s233 = smul.addr %s232, 24
        %s234 = scalar_lea.vmem [#allocation9], %s233
        %v235 = vld [vmem:[%s200] sm:$0xff]
        %s236 = sld [smem:[#allocation7]]
        %v237 = vstv %s236
        %v238 = vmul.f32 %v235, %v237
        %s239 = scalar_lea.vmem %s200, 8 [#allocation2]
        %v240 = vld [vmem:[%s239] sm:$0xff]
        %s241 = sld [smem:[#allocation7 + $0x1]]
        %v242 = vstv %s241
        %v243 = vmul.f32 %v240, %v242
        %v244 = vadd.f32 %v238, %v243
        %s245 = scalar_lea.vmem %s200, 16 [#allocation2]
        %v246 = vld [vmem:[%s245] sm:$0xff]
        %s247 = sld [smem:[#allocation7 + $0x2]]
        %v248 = vstv %s247
        %v249 = vmul.f32 %v246, %v248
        %v250 = vadd.f32 %v244, %v249
        %s251 = scalar_lea.vmem %s200, 24 [#allocation2]
        %v252 = vld [vmem:[%s251] sm:$0xff]
        %s253 = sld [smem:[#allocation7 + $0x3]]
        %v254 = vstv %s253
        %v255 = vmul.f32 %v252, %v254
        %v256 = vadd.f32 %v250, %v255
        %s257 = sld [smem:[#allocation8]]
        %v258 = vstv %s257
        %v259 = vadd.f32 %v256, %v258
        %v260 = vsub.f32 0.0, %v259
        %v261 = vmul.f32 %v260, 1.442695
        %v262 = vpow.pop %v261
        %v263 = vadd.f32 %v262, 1.0
        %v264 = vrcp.pop %v263
        %v265 = vmul.f32 %v263, %v264
        %v266 = vsub.f32 1.0, %v265
        %v267 = vmul.f32 %v264, %v266
        %v268 = vadd.f32 %v264, %v267
        %vm269 = vweird.f32 %v263
        %vm270 = vweird.f32 %v264
        %vm271 = vmor %vm269, %vm270
        %v272 = vsel %vm271, %v264, %v268
        %v273 = vand.u32 2147483647, %v263
        %vm274 = vcmp.eq.f32.partialorder %v273, 8.507059e+37
        %v275 = vand.u32 %v263, 2147483648
        %v276 = vor.u32 1.1754944e-38, %v275
        %v277 = vsel %vm274, %v276, %v272
        %v278 = vmul.f32 1.0, %v277
        %279 = vst [vmem:[%s234] sm:$0xff] %v278
        %v280 = vld [vmem:[%s200] sm:$0xff]
        %s281 = sld [smem:[#allocation7 + $0x80]]
        %v282 = vstv %s281
        %v283 = vmul.f32 %v280, %v282
        %v284 = vld [vmem:[%s239] sm:$0xff]
        %s285 = sld [smem:[#allocation7 + $0x81]]
        %v286 = vstv %s285
        %v287 = vmul.f32 %v284, %v286
        %v288 = vadd.f32 %v283, %v287
        %v289 = vld [vmem:[%s245] sm:$0xff]
        %s290 = sld [smem:[#allocation7 + $0x82]]
        %v291 = vstv %s290
        %v292 = vmul.f32 %v289, %v291
        %v293 = vadd.f32 %v288, %v292
        %v294 = vld [vmem:[%s251] sm:$0xff]
        %s295 = sld [smem:[#allocation7 + $0x83]]
        %v296 = vstv %s295
        %v297 = vmul.f32 %v294, %v296
        %v298 = vadd.f32 %v293, %v297
        %s299 = sld [smem:[#allocation8 + $0x1]]
        %v300 = vstv %s299
        %v301 = vadd.f32 %v298, %v300
        %v302 = vsub.f32 0.0, %v301
        %v303 = vmul.f32 %v302, 1.442695
        %v304 = vpow.pop %v303
        %v305 = vadd.f32 %v304, 1.0
        %v306 = vrcp.pop %v305
        %v307 = vmul.f32 %v305, %v306
        %v308 = vsub.f32 1.0, %v307
        %v309 = vmul.f32 %v306, %v308
        %v310 = vadd.f32 %v306, %v309
        %vm311 = vweird.f32 %v305
        %vm312 = vweird.f32 %v306
        %vm313 = vmor %vm311, %vm312
        %v314 = vsel %vm313, %v306, %v310
        %v315 = vand.u32 2147483647, %v305
        %vm316 = vcmp.eq.f32.partialorder %v315, 8.507059e+37
        %v317 = vand.u32 %v305, 2147483648
        %v318 = vor.u32 1.1754944e-38, %v317
        %v319 = vsel %vm316, %v318, %v314
        %v320 = vmul.f32 1.0, %v319
        %s321 = scalar_lea.vmem %s234, 8 [#allocation9]
        %322 = vst [vmem:[%s321] sm:$0xff] %v320
        %v323 = vld [vmem:[%s200] sm:$0xff]
        %s324 = sld [smem:[#allocation7 + $0x100]]
        %v325 = vstv %s324
        %v326 = vmul.f32 %v323, %v325
        %v327 = vld [vmem:[%s239] sm:$0xff]
        %s328 = sld [smem:[#allocation7 + $0x101]]
        %v329 = vstv %s328
        %v330 = vmul.f32 %v327, %v329
        %v331 = vadd.f32 %v326, %v330
        %v332 = vld [vmem:[%s245] sm:$0xff]
        %s333 = sld [smem:[#allocation7 + $0x102]]
        %v334 = vstv %s333
        %v335 = vmul.f32 %v332, %v334
        %v336 = vadd.f32 %v331, %v335
        %v337 = vld [vmem:[%s251] sm:$0xff]
        %s338 = sld [smem:[#allocation7 + $0x103]]
        %v339 = vstv %s338
        %v340 = vmul.f32 %v337, %v339
        %v341 = vadd.f32 %v336, %v340
        %s342 = sld [smem:[#allocation8 + $0x2]]
        %v343 = vstv %s342
        %v344 = vadd.f32 %v341, %v343
        %v345 = vsub.f32 0.0, %v344
        %v346 = vmul.f32 %v345, 1.442695
        %v347 = vpow.pop %v346
        %v348 = vadd.f32 %v347, 1.0
        %v349 = vrcp.pop %v348
        %v350 = vmul.f32 %v348, %v349
        %v351 = vsub.f32 1.0, %v350
        %v352 = vmul.f32 %v349, %v351
        %v353 = vadd.f32 %v349, %v352
        %vm354 = vweird.f32 %v348
        %vm355 = vweird.f32 %v349
        %vm356 = vmor %vm354, %vm355
        %v357 = vsel %vm356, %v349, %v353
        %v358 = vand.u32 2147483647, %v348
        %vm359 = vcmp.eq.f32.partialorder %v358, 8.507059e+37
        %v360 = vand.u32 %v348, 2147483648
        %v361 = vor.u32 1.1754944e-38, %v360
        %v362 = vsel %vm359, %v361, %v357
        %v363 = vmul.f32 1.0, %v362
        %s364 = scalar_lea.vmem %s234, 16 [#allocation9]
        %365 = vst [vmem:[%s364] sm:$0xff] %v363
        %s366 = sand.u32 %s114, 1
        %s367 = scalar_lea.sflag [#allocation4], %s366
        %s368 = sand.u32 %s114, 1
        %s369 = smul.addr %s368, 24
        %s370 = scalar_lea.vmem [#allocation9], %s369
        // Predicated region
        $region45: #{tpu_custom_call.1} parent=31 // pred_check
          %p371 = pneg %p124
        $region46: #{tpu_custom_call.1} parent=31 // pred_check_branch
          %373 = sbr.rel (%p371) target = $region48
        $region47: #{tpu_custom_call.1} parent=31 // pred_region
          %375 = vsyncadd %s367, 0
          %s376 = smul.addr %s26, 3
          %s377 = sadd.s32 %s27, %s376
          %s378 = smul.addr %s377, 8
          %s379 = scalar_lea.hbm %s3, %s378
          %s380 = sshll.u32 %s370, 4
          %s381 = int_to_ptr.vmem [resolvable:$true] %s380
          %s382 = sshll.u32 %s379, 4
          %s383 = int_to_ptr.hbm [resolvable:$true] %s382
          %388 = dma.vmem_to_hbm [thread:$0]  %s381, 384, %s383, %s367, 128, 128, 8
        $region48: #{tpu_custom_call.1} parent=31 // pred_fallthru
          _
      $region32: #{tpu_custom_call.1} parent=5 // pred_fallthru
        _
      %p389 = scmp.le.s32.totalorder 2, %s17
      // Predicated region
      $region49: #{tpu_custom_call.1} parent=5 // pred_check
        %p390 = pneg %p389
      $region50: #{tpu_custom_call.1} parent=5 // pred_check_branch
        %392 = sbr.rel (%p390) target = $region52
      $region51: #{tpu_custom_call.1} parent=5 // pred_region
        %s393 = ssub.s32 %s17, 2
        // Predicated region
        $region53: #{tpu_custom_call.1} parent=51 // pred_check
          %p394 = pneg %p130
        $region54: #{tpu_custom_call.1} parent=51 // pred_check_branch
          %396 = sbr.rel (%p394) target = $region56
        $region55: #{tpu_custom_call.1} parent=51 // pred_region
          %s397 = sand.u32 %s115, 1
          %s398 = scalar_lea.sflag [#allocation4], %s397
          %s399 = sand.u32 %s115, 1
          %s400 = smul.addr %s399, 24
          %s401 = scalar_lea.vmem [#allocation9], %s400
          %403 = dma.done %s398, 384
        $region56: #{tpu_custom_call.1} parent=51 // pred_fallthru
          _
      $region52: #{tpu_custom_call.1} parent=5 // pred_fallthru
        _
    $region6: #{tpu_custom_call.1} parent=1 // loop_footer
      %s21 = sadd.s32 1, %s17
    $region7: #{tpu_custom_call.1} parent=1 // loop_footer_branch
      %16 = sbr.rel target = $region3
    $region8: #{tpu_custom_call.1} parent=1 // loop_exit
      _
    %404 = vsyncpa [#allocation3], 1
    %s405 = scalar_lea.sflag [#allocation3], 1
    %406 = vsyncpa %s405, 1
    %407 = vsyncpa [#allocation4], 1
    %s408 = scalar_lea.sflag [#allocation4], 1
    %409 = vsyncpa %s408, 1
    %410 = vsyncpa [#allocation5], 1
    %s411 = scalar_lea.sflag [#allocation5], 1
    %412 = vsyncpa %s411, 1
    %413 = vsyncpa [#allocation6], 1
    %s414 = scalar_lea.sflag [#allocation6], 1
    %415 = vsyncpa %s414, 1

</llo_original>
